<compile_context>
chip_gen: v6e
topology: v6e:2x2x1
jax: 0.10.0
libtpu: 0.0.40
codegen_flags: <defaults>
</compile_context>

<pallas_src>
import numpy as np
import jax
import jax.numpy as jnp
from jax import lax
from jax.experimental import pallas as pl
from jax.experimental.pallas import tpu as pltpu


_TAPS = [(dy, dx) for dy in (-1, 0, 1) for dx in (-1, 0, 1)]  # (kh-1, kw-1), row-major


# ----------------------------------------------------------------------------
# Kernel factory (C, W, HWp, Nb are static)
# ----------------------------------------------------------------------------
def _make_kernel(C, W, HWp, Nb):
    def kernel(x_ref, w1_ref, b_ref, mw_ref, w2_ref, out_ref):
        # x_ref : (Nb, 2C, HWp)   out_ref : (Nb, C, 2*HWp)
        # w1_ref/w2_ref : (C, C) with BN scales folded in
        # b_ref : (C, 3) packed biases [b1, b2, b3]
        # mw_ref: (9, C, HWp) = mask * depthwise_tap * BN2_scale
        b1 = b_ref[:, 0:1]
        b2 = b_ref[:, 1:2]
        b3 = b_ref[:, 2:3]

        for n in range(Nb):  # short static unrolled per-image loop
            # Passthrough branch written immediately (fused concat + shuffle; frees vregs).
            out_ref[n, :, :HWp] = x_ref[n, :C, :]

            x2 = x_ref[n, C:, :].astype(jnp.float32)           # (C, HWp)

            # --- 1x1 conv (BN1 scale folded into w1) -> bias -> ReLU ---
            y = jnp.dot(w1_ref[...], x2, preferred_element_type=jnp.float32)
            y = jnp.maximum(y + b1, 0.0)

            # --- 3x3 depthwise conv, stride=1, pad=1 (BN2 scale folded into taps) ---
            # Spatial tap (dy,dx) == lane roll of the flattened spatial axis by -(dy*W+dx);
            # border validity + tap weight are pre-multiplied into mw_ref on the host.
            acc = y * mw_ref[4]                                # center tap (dy=0, dx=0)
            for t, (dy, dx) in enumerate(_TAPS):
                if dy == 0 and dx == 0:
                    continue
                off = dy * W + dx                              # source flat-index offset
                acc = acc + pltpu.roll(y, (-off) % HWp, 1) * mw_ref[t]
            acc = acc + b2

            # --- 1x1 conv (BN3 scale folded into w2) -> bias -> ReLU ---
            z = jnp.dot(w2_ref[...], acc, preferred_element_type=jnp.float32)
            z = jnp.maximum(z + b3, 0.0)

            out_ref[n, :, HWp:] = z.astype(out_ref.dtype)

    return kernel


def _tap_masks(H, W, HWp):
    """(9, HWp) float32 validity masks for the 3x3 taps (zero in the lane-pad region)."""
    hh = np.arange(H).reshape(H, 1)
    ww = np.arange(W).reshape(1, W)
    rows = []
    for dy, dx in _TAPS:
        m = ((hh + dy >= 0) & (hh + dy < H) & (ww + dx >= 0) & (ww + dx < W))
        m = m.astype(np.float32).reshape(H * W)
        rows.append(np.pad(m, (0, HWp - H * W)))
    return jnp.asarray(np.stack(rows, axis=0), dtype=jnp.float32)


# ----------------------------------------------------------------------------
# Full forward (benchmodel=1, stride=1); input/output NCHW like PyTorch
# ----------------------------------------------------------------------------
def inverted_residual_forward(x_nchw, params, *, nb=None):
    N, C2, H, W = x_nchw.shape
    C = C2 // 2
    HW = H * W
    HWp = ((HW + 127) // 128) * 128                 # lane-dense spatial padding

    # --- one-time host-side parameter folding ---
    f32 = jnp.float32
    s1 = params["s1"].astype(f32)
    s2 = params["s2"].astype(f32)
    s3 = params["s3"].astype(f32)
    w1f = s1[:, None] * params["w1"].astype(f32)                      # (C, C)
    w2f = s3[:, None] * params["w2"].astype(f32)                      # (C, C)
    taps = (params["wdw"].astype(f32).reshape(C, 9) * s2[:, None]).T  # (9, C)
    masks = _tap_masks(H, W, HWp)                                     # (9, HWp)
    mw = taps[:, :, None] * masks[:, None, :]                         # (9, C, HWp)
    biases = jnp.stack(
        [params["b1"], params["b2"], params["b3"]], axis=1).astype(f32)  # (C, 3)

    # --- batching: Nb images per grid step, keep >=4 grid steps when possible ---
    if nb is None:
        nb = max(1, min(16, (N + 3) // 4))
    G = (N + nb - 1) // nb
    Npad = G * nb

    x_flat = x_nchw.reshape(N, C2, HW)
    if HWp != HW or Npad != N:
        x_flat = jnp.pad(x_flat, ((0, Npad - N), (0, 0), (0, HWp - HW)))

    kernel = _make_kernel(C, W, HWp, nb)
    full = lambda shape: pl.BlockSpec(shape, lambda g, _n=len(shape): (0,) * _n)

    out = pl.pallas_call(
        kernel,
        out_shape=jax.ShapeDtypeStruct((Npad, C, 2 * HWp), x_nchw.dtype),
        grid_spec=pltpu.PrefetchScalarGridSpec(
            num_scalar_prefetch=0,
            grid=(G,),
            in_specs=[
                pl.BlockSpec((nb, C2, HWp), lambda g: (g, 0, 0)),  # x (both halves)
                full((C, C)),        # w1 (scale-folded)
                full((C, 3)),        # packed biases [b1, b2, b3]
                full((9, C, HWp)),   # mask * depthwise tap * s2
                full((C, C)),        # w2 (scale-folded)
            ],
            out_specs=pl.BlockSpec((nb, C, 2 * HWp), lambda g: (g, 0, 0)),
        ),
        compiler_params=pltpu.CompilerParams(dimension_semantics=("parallel",)),
    )(x_flat, w1f, biases, mw, w2f)

    # out[n, c, s*HWp + hw] is already the shuffled channel (2c+s).
    if Npad != N:
        out = out[:N]
    if HWp != HW:
        out = out.reshape(N, C, 2, HWp)[:, :, :, :HW]
    return out.reshape(N, C2, H, W)


# ----------------------------------------------------------------------------
# Deterministic parameter construction (BN folded into scale/bias)
# ----------------------------------------------------------------------------
def make_params(key, c, dtype=jnp.float32, eps=1e-5):
    ks = jax.random.split(key, 15)

    def bn_fold(kg, kb, km, kv):
        gamma = 1.0 + 0.1 * jax.random.normal(kg, (c,), dtype)
        beta = 0.1 * jax.random.normal(kb, (c,), dtype)
        mean = 0.1 * jax.random.normal(km, (c,), dtype)
        var = jnp.abs(jax.random.normal(kv, (c,), dtype)) + 0.5
        scale = gamma / jnp.sqrt(var + eps)
        bias = beta - mean * scale
        return scale, bias

    w1 = 0.1 * jax.random.normal(ks[0], (c, c), dtype)        # (Cout, Cin)
    w2 = 0.1 * jax.random.normal(ks[1], (c, c), dtype)        # (Cout, Cin)
    wdw = 0.1 * jax.random.normal(ks[2], (c, 3, 3), dtype)    # depthwise (C, kh, kw)
    s1, b1 = bn_fold(ks[3], ks[4], ks[5], ks[6])
    s2, b2 = bn_fold(ks[7], ks[8], ks[9], ks[10])
    s3, b3 = bn_fold(ks[11], ks[12], ks[13], ks[14])
    return dict(w1=w1, s1=s1, b1=b1, wdw=wdw, s2=s2, b2=b2, w2=w2, s3=s3, b3=b3)


# ----------------------------------------------------------------------------
# Pure-JAX reference (lax.conv based, NCHW end-to-end) for a correctness check
# ----------------------------------------------------------------------------
def inverted_residual_ref(x_nchw, p):
    N, C2, H, W = x_nchw.shape
    C = C2 // 2
    x1 = x_nchw[:, :C]
    x2 = x_nchw[:, C:]

    def bn(v, s, b):
        return v * s.reshape(1, C, 1, 1) + b.reshape(1, C, 1, 1)

    y = jnp.einsum("oc,nchw->nohw", p["w1"], x2)
    y = jnp.maximum(bn(y, p["s1"], p["b1"]), 0.0)
    dw = lax.conv_general_dilated(
        y, p["wdw"].reshape(C, 1, 3, 3),
        window_strides=(1, 1), padding=((1, 1), (1, 1)),
        dimension_numbers=("NCHW", "OIHW", "NCHW"),
        feature_group_count=C)
    dw = bn(dw, p["s2"], p["b2"])
    z = jnp.einsum("oc,nchw->nohw", p["w2"], dw)
    z = jnp.maximum(bn(z, p["s3"], p["b3"]), 0.0)

    out = jnp.concatenate([x1, z], axis=1)
    # channel_shuffle(groups=2)
    out = out.reshape(N, 2, C, H, W).transpose(0, 2, 1, 3, 4).reshape(N, C2, H, W)
    return out


if __name__ == "__main__":
    key = jax.random.PRNGKey(0)
    # InvertedResidual(inp=32, oup=32, stride=1, benchmodel=1); oup_inc = 16
    # Case 1: HW multiple of 128, nb auto (=1, grid=2).
    # Case 2: HW=196 -> padded to 256, nb=2 with batch padding (N=5 -> 6, grid=3).
    cases = [(2, 32, 16, 16, None), (5, 32, 14, 14, 2)]
    for (N, INP, H, W, nb) in cases:
        C = INP // 2
        kx, kp, key = jax.random.split(key, 3)
        x = jax.random.normal(kx, (N, INP, H, W), jnp.float32)   # NCHW, like PyTorch
        params = make_params(kp, C)

        fwd = jax.jit(lambda xx, pp: inverted_residual_forward(xx, pp, nb=nb))
        ref_fn = jax.jit(inverted_residual_ref)

        out = jax.block_until_ready(fwd(x, params))
        ref = jax.block_until_ready(ref_fn(x, params))

        assert out.shape == (N, INP, H, W), out.shape
        err = float(jnp.max(jnp.abs(out - ref)))
        assert jnp.allclose(out, ref, atol=1e-3, rtol=1e-3), err
    print("KERNEL_OK")
</pallas_src>

<mosaic_0001>
module attributes {stable_mosaic.version = 11 : i64} {
  func.func @kernel(%arg0: i32, %arg1: memref<1x32x256xf32, #tpu.memory_space<vmem>>, %arg2: memref<16x16xf32, #tpu.memory_space<vmem>>, %arg3: memref<16x3xf32, #tpu.memory_space<vmem>>, %arg4: memref<9x16x256xf32, #tpu.memory_space<vmem>>, %arg5: memref<16x16xf32, #tpu.memory_space<vmem>>, %arg6: memref<1x16x512xf32, #tpu.memory_space<vmem>>) attributes {dimension_semantics = [#tpu.dimension_semantics<parallel>], iteration_bounds = array<i64: 2>, scalar_prefetch = 0 : i64, scratch_operands = 0 : i64, tpu.core_type = #tpu.core_type<tc>, window_params = [{transform_indices = @transform_0, window_bounds = array<i64: 1, 32, 256>}, {pipeline_mode = #tpu.pipeline_mode<synchronous>, transform_indices = @transform_1, window_bounds = array<i64: 16, 16>}, {pipeline_mode = #tpu.pipeline_mode<synchronous>, transform_indices = @transform_2, window_bounds = array<i64: 16, 3>}, {pipeline_mode = #tpu.pipeline_mode<synchronous>, transform_indices = @transform_3, window_bounds = array<i64: 9, 16, 256>}, {pipeline_mode = #tpu.pipeline_mode<synchronous>, transform_indices = @transform_4, window_bounds = array<i64: 16, 16>}, {transform_indices = @transform_5, window_bounds = array<i64: 1, 16, 512>}]} {
    %c0 = arith.constant 0 : index
    %c0_0 = arith.constant 0 : index
    %0 = vector.load %arg3[%c0, %c0_0] : memref<16x3xf32, #tpu.memory_space<vmem>>, vector<16x1xf32>
    %c0_1 = arith.constant 0 : index
    %c1 = arith.constant 1 : index
    %1 = vector.load %arg3[%c0_1, %c1] : memref<16x3xf32, #tpu.memory_space<vmem>>, vector<16x1xf32>
    %c0_2 = arith.constant 0 : index
    %c2 = arith.constant 2 : index
    %2 = vector.load %arg3[%c0_2, %c2] : memref<16x3xf32, #tpu.memory_space<vmem>>, vector<16x1xf32>
    %c0_3 = arith.constant 0 : index
    %c0_4 = arith.constant 0 : index
    %c0_5 = arith.constant 0 : index
    %3 = vector.load %arg1[%c0_3, %c0_4, %c0_5] : memref<1x32x256xf32, #tpu.memory_space<vmem>>, vector<1x16x256xf32>
    %4 = vector.shape_cast %3 : vector<1x16x256xf32> to vector<16x256xf32>
    %c0_6 = arith.constant 0 : index
    %c0_7 = arith.constant 0 : index
    %c0_8 = arith.constant 0 : index
    %5 = vector.load %arg6[%c0_6, %c0_7, %c0_8] : memref<1x16x512xf32, #tpu.memory_space<vmem>>, vector<1x16x256xf32>
    %6 = vector.shape_cast %5 : vector<1x16x256xf32> to vector<16x256xf32>
    %7 = vector.shape_cast %4 : vector<16x256xf32> to vector<1x16x256xf32>
    tpu.vector_store %arg6[%c0_6, %c0_7, %c0_8], %7 {strides = array<i32>} : memref<1x16x512xf32, #tpu.memory_space<vmem>>, vector<1x16x256xf32>,
    %c0_9 = arith.constant 0 : index
    %c16 = arith.constant 16 : index
    %c0_10 = arith.constant 0 : index
    %8 = vector.load %arg1[%c0_9, %c16, %c0_10] : memref<1x32x256xf32, #tpu.memory_space<vmem>>, vector<1x16x256xf32>
    %9 = vector.shape_cast %8 : vector<1x16x256xf32> to vector<16x256xf32>
    %c0_11 = arith.constant 0 : index
    %c0_12 = arith.constant 0 : index
    %10 = vector.load %arg2[%c0_11, %c0_12] : memref<16x16xf32, #tpu.memory_space<vmem>>, vector<16x16xf32>
    %cst = arith.constant dense<0.000000e+00> : vector<16x256xf32>
    %11 = tpu.matmul %10, %9, %cst {dimension_numbers = #tpu.dot_dimension_numbers<[1], [0], [0], [1], [0, 0, 1, 1], [], []>} : vector<16x16xf32>, vector<16x256xf32>, vector<16x256xf32> -> vector<16x256xf32>
    %12 = vector.broadcast %0 : vector<16x1xf32> to vector<16x256xf32>
    %13 = arith.addf %11, %12 : vector<16x256xf32>
    %cst_13 = arith.constant 0.000000e+00 : f32
    %14 = vector.broadcast %cst_13 : f32 to vector<16x256xf32>
    %15 = arith.maximumf %13, %14 : vector<16x256xf32>
    %c4 = arith.constant 4 : index
    %c0_14 = arith.constant 0 : index
    %c0_15 = arith.constant 0 : index
    %16 = vector.load %arg4[%c4, %c0_14, %c0_15] : memref<9x16x256xf32, #tpu.memory_space<vmem>>, vector<1x16x256xf32>
    %17 = vector.shape_cast %16 : vector<1x16x256xf32> to vector<16x256xf32>
    %18 = arith.mulf %15, %17 : vector<16x256xf32>
    %c17_i32 = arith.constant 17 : i32
    %19 = tpu.dynamic_rotate %15 by %c17_i32 dim 1 : vector<16x256xf32>, i32 -> vector<16x256xf32>
    %c0_16 = arith.constant 0 : index
    %c0_17 = arith.constant 0 : index
    %c0_18 = arith.constant 0 : index
    %20 = vector.load %arg4[%c0_16, %c0_17, %c0_18] : memref<9x16x256xf32, #tpu.memory_space<vmem>>, vector<1x16x256xf32>
    %21 = vector.shape_cast %20 : vector<1x16x256xf32> to vector<16x256xf32>
    %22 = arith.mulf %19, %21 : vector<16x256xf32>
    %23 = arith.addf %18, %22 : vector<16x256xf32>
    %c16_i32 = arith.constant 16 : i32
    %24 = tpu.dynamic_rotate %15 by %c16_i32 dim 1 : vector<16x256xf32>, i32 -> vector<16x256xf32>
    %c1_19 = arith.constant 1 : index
    %c0_20 = arith.constant 0 : index
    %c0_21 = arith.constant 0 : index
    %25 = vector.load %arg4[%c1_19, %c0_20, %c0_21] : memref<9x16x256xf32, #tpu.memory_space<vmem>>, vector<1x16x256xf32>
    %26 = vector.shape_cast %25 : vector<1x16x256xf32> to vector<16x256xf32>
    %27 = arith.mulf %24, %26 : vector<16x256xf32>
    %28 = arith.addf %23, %27 : vector<16x256xf32>
    %c15_i32 = arith.constant 15 : i32
    %29 = tpu.dynamic_rotate %15 by %c15_i32 dim 1 : vector<16x256xf32>, i32 -> vector<16x256xf32>
    %c2_22 = arith.constant 2 : index
    %c0_23 = arith.constant 0 : index
    %c0_24 = arith.constant 0 : index
    %30 = vector.load %arg4[%c2_22, %c0_23, %c0_24] : memref<9x16x256xf32, #tpu.memory_space<vmem>>, vector<1x16x256xf32>
    %31 = vector.shape_cast %30 : vector<1x16x256xf32> to vector<16x256xf32>
    %32 = arith.mulf %29, %31 : vector<16x256xf32>
    %33 = arith.addf %28, %32 : vector<16x256xf32>
    %c1_i32 = arith.constant 1 : i32
    %34 = tpu.dynamic_rotate %15 by %c1_i32 dim 1 : vector<16x256xf32>, i32 -> vector<16x256xf32>
    %c3 = arith.constant 3 : index
    %c0_25 = arith.constant 0 : index
    %c0_26 = arith.constant 0 : index
    %35 = vector.load %arg4[%c3, %c0_25, %c0_26] : memref<9x16x256xf32, #tpu.memory_space<vmem>>, vector<1x16x256xf32>
    %36 = vector.shape_cast %35 : vector<1x16x256xf32> to vector<16x256xf32>
    %37 = arith.mulf %34, %36 : vector<16x256xf32>
    %38 = arith.addf %33, %37 : vector<16x256xf32>
    %c255_i32 = arith.constant 255 : i32
    %39 = tpu.dynamic_rotate %15 by %c255_i32 dim 1 : vector<16x256xf32>, i32 -> vector<16x256xf32>
    %c5 = arith.constant 5 : index
    %c0_27 = arith.constant 0 : index
    %c0_28 = arith.constant 0 : index
    %40 = vector.load %arg4[%c5, %c0_27, %c0_28] : memref<9x16x256xf32, #tpu.memory_space<vmem>>, vector<1x16x256xf32>
    %41 = vector.shape_cast %40 : vector<1x16x256xf32> to vector<16x256xf32>
    %42 = arith.mulf %39, %41 : vector<16x256xf32>
    %43 = arith.addf %38, %42 : vector<16x256xf32>
    %c241_i32 = arith.constant 241 : i32
    %44 = tpu.dynamic_rotate %15 by %c241_i32 dim 1 : vector<16x256xf32>, i32 -> vector<16x256xf32>
    %c6 = arith.constant 6 : index
    %c0_29 = arith.constant 0 : index
    %c0_30 = arith.constant 0 : index
    %45 = vector.load %arg4[%c6, %c0_29, %c0_30] : memref<9x16x256xf32, #tpu.memory_space<vmem>>, vector<1x16x256xf32>
    %46 = vector.shape_cast %45 : vector<1x16x256xf32> to vector<16x256xf32>
    %47 = arith.mulf %44, %46 : vector<16x256xf32>
    %48 = arith.addf %43, %47 : vector<16x256xf32>
    %c240_i32 = arith.constant 240 : i32
    %49 = tpu.dynamic_rotate %15 by %c240_i32 dim 1 : vector<16x256xf32>, i32 -> vector<16x256xf32>
    %c7 = arith.constant 7 : index
    %c0_31 = arith.constant 0 : index
    %c0_32 = arith.constant 0 : index
    %50 = vector.load %arg4[%c7, %c0_31, %c0_32] : memref<9x16x256xf32, #tpu.memory_space<vmem>>, vector<1x16x256xf32>
    %51 = vector.shape_cast %50 : vector<1x16x256xf32> to vector<16x256xf32>
    %52 = arith.mulf %49, %51 : vector<16x256xf32>
    %53 = arith.addf %48, %52 : vector<16x256xf32>
    %c239_i32 = arith.constant 239 : i32
    %54 = tpu.dynamic_rotate %15 by %c239_i32 dim 1 : vector<16x256xf32>, i32 -> vector<16x256xf32>
    %c8 = arith.constant 8 : index
    %c0_33 = arith.constant 0 : index
    %c0_34 = arith.constant 0 : index
    %55 = vector.load %arg4[%c8, %c0_33, %c0_34] : memref<9x16x256xf32, #tpu.memory_space<vmem>>, vector<1x16x256xf32>
    %56 = vector.shape_cast %55 : vector<1x16x256xf32> to vector<16x256xf32>
    %57 = arith.mulf %54, %56 : vector<16x256xf32>
    %58 = arith.addf %53, %57 : vector<16x256xf32>
    %59 = vector.broadcast %1 : vector<16x1xf32> to vector<16x256xf32>
    %60 = arith.addf %58, %59 : vector<16x256xf32>
    %c0_35 = arith.constant 0 : index
    %c0_36 = arith.constant 0 : index
    %61 = vector.load %arg5[%c0_35, %c0_36] : memref<16x16xf32, #tpu.memory_space<vmem>>, vector<16x16xf32>
    %cst_37 = arith.constant dense<0.000000e+00> : vector<16x256xf32>
    %62 = tpu.matmul %61, %60, %cst_37 {dimension_numbers = #tpu.dot_dimension_numbers<[1], [0], [0], [1], [0, 0, 1, 1], [], []>} : vector<16x16xf32>, vector<16x256xf32>, vector<16x256xf32> -> vector<16x256xf32>
    %63 = vector.broadcast %2 : vector<16x1xf32> to vector<16x256xf32>
    %64 = arith.addf %62, %63 : vector<16x256xf32>
    %cst_38 = arith.constant 0.000000e+00 : f32
    %65 = vector.broadcast %cst_38 : f32 to vector<16x256xf32>
    %66 = arith.maximumf %64, %65 : vector<16x256xf32>
    %c0_39 = arith.constant 0 : index
    %c0_40 = arith.constant 0 : index
    %c256 = arith.constant 256 : index
    %67 = vector.load %arg6[%c0_39, %c0_40, %c256] : memref<1x16x512xf32, #tpu.memory_space<vmem>>, vector<1x16x256xf32>
    %68 = vector.shape_cast %67 : vector<1x16x256xf32> to vector<16x256xf32>
    %69 = vector.shape_cast %66 : vector<16x256xf32> to vector<1x16x256xf32>
    tpu.vector_store %arg6[%c0_39, %c0_40, %c256], %69 {strides = array<i32>} : memref<1x16x512xf32, #tpu.memory_space<vmem>>, vector<1x16x256xf32>,
    return
  }
  func.func @transform_0(%arg0: i32) -> (i32, i32, i32) {
    %c0_i32 = arith.constant 0 : i32
    %c0_i32_0 = arith.constant 0 : i32
    %c0_i32_1 = arith.constant 0 : i32
    return %arg0, %c0_i32, %c0_i32_0 : i32, i32, i32
  }
  func.func @transform_1(%arg0: i32) -> (i32, i32) {
    %c0_i32 = arith.constant 0 : i32
    %c0_i32_0 = arith.constant 0 : i32
    %c0_i32_1 = arith.constant 0 : i32
    return %c0_i32, %c0_i32_0 : i32, i32
  }
  func.func @transform_2(%arg0: i32) -> (i32, i32) {
    %c0_i32 = arith.constant 0 : i32
    %c0_i32_0 = arith.constant 0 : i32
    %c0_i32_1 = arith.constant 0 : i32
    return %c0_i32, %c0_i32_0 : i32, i32
  }
  func.func @transform_3(%arg0: i32) -> (i32, i32, i32) {
    %c0_i32 = arith.constant 0 : i32
    %c0_i32_0 = arith.constant 0 : i32
    %c0_i32_1 = arith.constant 0 : i32
    %c0_i32_2 = arith.constant 0 : i32
    return %c0_i32, %c0_i32_0, %c0_i32_1 : i32, i32, i32
  }
  func.func @transform_4(%arg0: i32) -> (i32, i32) {
    %c0_i32 = arith.constant 0 : i32
    %c0_i32_0 = arith.constant 0 : i32
    %c0_i32_1 = arith.constant 0 : i32
    return %c0_i32, %c0_i32_0 : i32, i32
  }
  func.func @transform_5(%arg0: i32) -> (i32, i32, i32) {
    %c0_i32 = arith.constant 0 : i32
    %c0_i32_0 = arith.constant 0 : i32
    %c0_i32_1 = arith.constant 0 : i32
    return %arg0, %c0_i32, %c0_i32_0 : i32, i32, i32
  }
}

</mosaic_0001>

<llo_original>
// kernel: _lambda_.1
$region0: #{_lambda_.1}
  #allocation0 [shape = 'u32[]', space=smem, size = 0x4, offset = 0x4, fixed_abs, tag = 'smem constant byte address 0x4 - core index']
  #allocation1 [shape = 'u32[144,128]{1,0:T(1,128)}', space=vmem, size = 0x12000, scoped, tag = 'internal scratch']
  %s0 = inlined_call_operand.vmem [shape: f32[2,32,256], index: 0, kind: input, shape index: {}]
  %s1 = inlined_call_operand.vmem [shape: f32[16,16], index: 1, kind: input, shape index: {}]
  %s2 = inlined_call_operand.vmem [shape: f32[16,3], index: 2, kind: input, shape index: {}]
  %s3 = inlined_call_operand.vmem [shape: f32[9,16,256], index: 3, kind: input, shape index: {}]
  %s4 = inlined_call_operand.vmem [shape: f32[16,16], index: 4, kind: input, shape index: {}]
  %s5 = inlined_call_operand.vmem [shape: f32[2,16,512], index: 5, kind: output, shape index: {}]
  %s6 = sld [smem:[#allocation0]]
  $region53: #{_lambda_.1} parent=0
    _
  %s8 = ssub.s32 1, %s6
  %s9 = scalar_select 0, %s8, %s6
  loop: start=0, step=1, limit=4
  $region2: #{_lambda_.1} parent=0 // loop_pre_header
    _
  $region3: #{_lambda_.1} parent=0 // loop_header
    %s11 = sphi 0, %s15
    %p12 = scmp.ge.s32.totalorder %s11, 4
    %s21 = sphi 0, %s23
    %s24 = sphi 0, %s21
    %s25 = sphi 0, %s24
    %s41 = sphi 0, %s25
    %s45 = sphi 0, %s45
    %s47 = sphi 0, %s45
    %s48 = sphi 0, %s47
    %s62 = sphi 0, %s48
    %s66 = sphi 0, %s66
    %s68 = sphi 0, %s66
    %s69 = sphi 0, %s68
    %s83 = sphi 0, %s69
    %s87 = sphi 0, %s87
    %s89 = sphi 0, %s87
    %s90 = sphi 0, %s89
    %s104 = sphi 0, %s90
    %s108 = sphi 0, %s108
    %s110 = sphi 0, %s108
    %s111 = sphi 0, %s110
    %s125 = sphi 0, %s111
    %s131 = sphi 0, %s133
    %s134 = sphi 0, %s131
    %s135 = sphi 0, %s134
    %s151 = sphi 0, %s135
  $region4: #{_lambda_.1} parent=0 // loop_header_branch
    %14 = sbr.rel (%p12) target = $region8
  $region5: #{_lambda_.1} parent=0 // loop_body
    %s16 = ssub.s32 %s11, 1
    %s17 = ssub.s32 %s11, 2
    %s18 = sadd.s32 %s11, 1
    %s19 = ssub.s32 %s11, %s18
    %p20 = scmp.eq.s32.totalorder %s19, 0
    %s22 = sadd.s32 %s21, 1
    %s23 = scalar_select %p20, %s21, %s22
    %p26 = pneg %p20
    %p27 = scmp.eq.s32.totalorder %s11, 1
    %p28 = por %p26, %p27
    %p29 = scmp.ne.s32.totalorder %s21, %s24
    %p30 = scmp.eq.s32.totalorder %s11, 0
    %p31 = por %p29, %p30
    %p32 = scmp.ne.s32.totalorder %s21, %s24
    %p33 = scmp.eq.s32.totalorder %s16, 1
    %p34 = por %p32, %p33
    %p35 = scmp.ne.s32.totalorder %s24, %s25
    %p36 = scmp.eq.s32.totalorder %s16, 0
    %p37 = por %p35, %p36
    %p38 = scmp.ne.s32.totalorder %s24, %s25
    %p39 = scmp.eq.s32.totalorder %s17, 1
    %p40 = por %p38, %p39
    %p42 = scmp.ne.s32.totalorder %s25, %s41
    %p43 = scmp.eq.s32.totalorder %s17, 0
    %p44 = por %p42, %p43
    %s46 = sadd.s32 %s45, 1
    %p49 = scmp.eq.s32.totalorder %s11, 1
    %p50 = scmp.ne.s32.totalorder %s45, %s47
    %p51 = scmp.eq.s32.totalorder %s11, 0
    %p52 = por %p50, %p51
    %p53 = scmp.ne.s32.totalorder %s45, %s47
    %p54 = scmp.eq.s32.totalorder %s16, 1
    %p55 = por %p53, %p54
    %p56 = scmp.ne.s32.totalorder %s47, %s48
    %p57 = scmp.eq.s32.totalorder %s16, 0
    %p58 = por %p56, %p57
    %p59 = scmp.ne.s32.totalorder %s47, %s48
    %p60 = scmp.eq.s32.totalorder %s17, 1
    %p61 = por %p59, %p60
    %p63 = scmp.ne.s32.totalorder %s48, %s62
    %p64 = scmp.eq.s32.totalorder %s17, 0
    %p65 = por %p63, %p64
    %s67 = sadd.s32 %s66, 1
    %p70 = scmp.eq.s32.totalorder %s11, 1
    %p71 = scmp.ne.s32.totalorder %s66, %s68
    %p72 = scmp.eq.s32.totalorder %s11, 0
    %p73 = por %p71, %p72
    %p74 = scmp.ne.s32.totalorder %s66, %s68
    %p75 = scmp.eq.s32.totalorder %s16, 1
    %p76 = por %p74, %p75
    %p77 = scmp.ne.s32.totalorder %s68, %s69
    %p78 = scmp.eq.s32.totalorder %s16, 0
    %p79 = por %p77, %p78
    %p80 = scmp.ne.s32.totalorder %s68, %s69
    %p81 = scmp.eq.s32.totalorder %s17, 1
    %p82 = por %p80, %p81
    %p84 = scmp.ne.s32.totalorder %s69, %s83
    %p85 = scmp.eq.s32.totalorder %s17, 0
    %p86 = por %p84, %p85
    %s88 = sadd.s32 %s87, 1
    %p91 = scmp.eq.s32.totalorder %s11, 1
    %p92 = scmp.ne.s32.totalorder %s87, %s89
    %p93 = scmp.eq.s32.totalorder %s11, 0
    %p94 = por %p92, %p93
    %p95 = scmp.ne.s32.totalorder %s87, %s89
    %p96 = scmp.eq.s32.totalorder %s16, 1
    %p97 = por %p95, %p96
    %p98 = scmp.ne.s32.totalorder %s89, %s90
    %p99 = scmp.eq.s32.totalorder %s16, 0
    %p100 = por %p98, %p99
    %p101 = scmp.ne.s32.totalorder %s89, %s90
    %p102 = scmp.eq.s32.totalorder %s17, 1
    %p103 = por %p101, %p102
    %p105 = scmp.ne.s32.totalorder %s90, %s104
    %p106 = scmp.eq.s32.totalorder %s17, 0
    %p107 = por %p105, %p106
    %s109 = sadd.s32 %s108, 1
    %p112 = scmp.eq.s32.totalorder %s11, 1
    %p113 = scmp.ne.s32.totalorder %s108, %s110
    %p114 = scmp.eq.s32.totalorder %s11, 0
    %p115 = por %p113, %p114
    %p116 = scmp.ne.s32.totalorder %s108, %s110
    %p117 = scmp.eq.s32.totalorder %s16, 1
    %p118 = por %p116, %p117
    %p119 = scmp.ne.s32.totalorder %s110, %s111
    %p120 = scmp.eq.s32.totalorder %s16, 0
    %p121 = por %p119, %p120
    %p122 = scmp.ne.s32.totalorder %s110, %s111
    %p123 = scmp.eq.s32.totalorder %s17, 1
    %p124 = por %p122, %p123
    %p126 = scmp.ne.s32.totalorder %s111, %s125
    %p127 = scmp.eq.s32.totalorder %s17, 0
    %p128 = por %p126, %p127
    %s129 = ssub.s32 %s11, %s18
    %p130 = scmp.eq.s32.totalorder %s129, 0
    %s132 = sadd.s32 %s131, 1
    %s133 = scalar_select %p130, %s131, %s132
    %p136 = pneg %p130
    %p137 = scmp.eq.s32.totalorder %s11, 1
    %p138 = por %p136, %p137
    %p139 = scmp.ne.s32.totalorder %s131, %s134
    %p140 = scmp.eq.s32.totalorder %s11, 0
    %p141 = por %p139, %p140
    %p142 = scmp.ne.s32.totalorder %s131, %s134
    %p143 = scmp.eq.s32.totalorder %s16, 1
    %p144 = por %p142, %p143
    %p145 = scmp.ne.s32.totalorder %s134, %s135
    %p146 = scmp.eq.s32.totalorder %s16, 0
    %p147 = por %p145, %p146
    %p148 = scmp.ne.s32.totalorder %s134, %s135
    %p149 = scmp.eq.s32.totalorder %s17, 1
    %p150 = por %p148, %p149
    %p152 = scmp.ne.s32.totalorder %s135, %s151
    %p153 = scmp.eq.s32.totalorder %s17, 0
    %p154 = por %p152, %p153
    %p155 = scmp.le.s32.totalorder 1, %s11
    %p156 = scmp.lt.s32.totalorder %s11, 3
    %p157 = pnand %p155, %p156
    %p158 = pneg %p157
    // Predicated region
    $region9: #{_lambda_.1} parent=5 // pred_check
      _
    $region10: #{_lambda_.1} parent=5 // pred_check_branch
      %160 = sbr.rel (%p157) target = $region12
    $region11: #{_lambda_.1} parent=5 // pred_region
      %s161 = ssub.s32 %s11, 1
      // Predicated region
      $region13: #{_lambda_.1} parent=11 // pred_check
        %p162 = pneg %p58
      $region14: #{_lambda_.1} parent=11 // pred_check_branch
        %164 = sbr.rel (%p162) target = $region16
      $region15: #{_lambda_.1} parent=11 // pred_region
        _
      $region16: #{_lambda_.1} parent=11 // pred_fallthru
        _
      // Predicated region
      $region17: #{_lambda_.1} parent=11 // pred_check
        %p165 = pneg %p79
      $region18: #{_lambda_.1} parent=11 // pred_check_branch
        %167 = sbr.rel (%p165) target = $region20
      $region19: #{_lambda_.1} parent=11 // pred_region
        _
      $region20: #{_lambda_.1} parent=11 // pred_fallthru
        _
      // Predicated region
      $region21: #{_lambda_.1} parent=11 // pred_check
        %p168 = pneg %p100
      $region22: #{_lambda_.1} parent=11 // pred_check_branch
        %170 = sbr.rel (%p168) target = $region24
      $region23: #{_lambda_.1} parent=11 // pred_region
        _
      $region24: #{_lambda_.1} parent=11 // pred_fallthru
        _
      // Predicated region
      $region25: #{_lambda_.1} parent=11 // pred_check
        %p171 = pneg %p121
      $region26: #{_lambda_.1} parent=11 // pred_check_branch
        %173 = sbr.rel (%p171) target = $region28
      $region27: #{_lambda_.1} parent=11 // pred_region
        _
      $region28: #{_lambda_.1} parent=11 // pred_fallthru
        _
    $region12: #{_lambda_.1} parent=5 // pred_fallthru
      _
    %p174 = scmp.lt.s32.totalorder %s11, 2
    // Predicated region
    $region29: #{_lambda_.1} parent=5 // pred_check
      %p175 = pneg %p174
    $region30: #{_lambda_.1} parent=5 // pred_check_branch
      %177 = sbr.rel (%p175) target = $region32
    $region31: #{_lambda_.1} parent=5 // pred_region
      // Predicated region
      $region33: #{_lambda_.1} parent=31 // pred_check
        %p178 = pneg %p31
      $region34: #{_lambda_.1} parent=31 // pred_check_branch
        %180 = sbr.rel (%p178) target = $region36
      $region35: #{_lambda_.1} parent=31 // pred_region
        %p181 = scmp.lt.s32.totalorder %s11, 1
        %s182 = scalar_select %p181, %s11, 1
        %s183 = smul.addr %s182, 8
        %s184 = smul.addr %s183, 8
        %s185 = scalar_lea.vmem %s0, %s184
      $region36: #{_lambda_.1} parent=31 // pred_fallthru
        _
    $region32: #{_lambda_.1} parent=5 // pred_fallthru
      _
    %p186 = scmp.le.s32.totalorder 1, %s11
    %p187 = scmp.lt.s32.totalorder %s11, 3
    %p188 = pnand %p186, %p187
    %p189 = pneg %p188
    // Predicated region
    $region37: #{_lambda_.1} parent=5 // pred_check
      _
    $region38: #{_lambda_.1} parent=5 // pred_check_branch
      %191 = sbr.rel (%p188) target = $region40
    $region39: #{_lambda_.1} parent=5 // pred_region
      %s192 = ssub.s32 %s11, 1
      %p193 = scmp.lt.s32.totalorder %s16, 1
      %s194 = scalar_select %p193, %s16, 1
      %s195 = smul.addr %s194, 8
      %s196 = smul.addr %s195, 8
      %s197 = scalar_lea.vmem %s0, %s196
      %p198 = pneg %p37
      %p199 = pneg %p34
      %p200 = pneg %p58
      %p201 = pneg %p55
      %p202 = pneg %p79
      %p203 = pneg %p76
      %p204 = pneg %p100
      %p205 = pneg %p97
      %p206 = pneg %p121
      %p207 = pneg %p118
      %p208 = pneg %p147
      %p209 = pneg %p144
      %p210 = scmp.lt.s32.totalorder %s16, 1
      %s211 = scalar_select %p210, %s16, 1
      %s212 = smul.addr %s211, 8
      %s213 = smul.addr %s212, 8
      %s214 = scalar_lea.vmem %s5, %s213
      %p215 = scmp.lt.s32.totalorder %s16, 1
      %s216 = scalar_select %p215, %s16, 1
      %s217 = smul.addr %s216, 8
      %s218 = smul.addr %s217, 8
      %s219 = scalar_lea.vmem %s0, %s218
      %p220 = scmp.lt.s32.totalorder %s16, 1
      %s221 = scalar_select %p220, %s16, 1
      %s222 = smul.addr %s221, 8
      %s223 = smul.addr %s222, 8
      %s224 = scalar_lea.vmem %s5, %s223
      %v225 = vld [vmem:[%s2] sm:$0xff]
      %v226 = vld [vmem:[%s2 + $0x8] sm:$0xff]
      %v227 = vld [vmem:[%s219] sm:$0xff]
      %v228 = vld [vmem:[%s219 + $0x8] sm:$0xff]
      %v229 = vld [vmem:[%s219 + $0x10] sm:$0xff]
      %v230 = vld [vmem:[%s219 + $0x18] sm:$0xff]
      %231 = vst [vmem:[%s224] sm:$0xff] %v227
      %232 = vst [vmem:[%s224 + $0x8] sm:$0xff] %v228
      %233 = vst [vmem:[%s224 + $0x20] sm:$0xff] %v229
      %234 = vst [vmem:[%s224 + $0x28] sm:$0xff] %v230
      %v235 = vld [vmem:[%s219 + $0x20] sm:$0xff]
      %v236 = vld [vmem:[%s219 + $0x28] sm:$0xff]
      %v237 = vld [vmem:[%s219 + $0x30] sm:$0xff]
      %v238 = vld [vmem:[%s219 + $0x38] sm:$0xff]
      %v239 = vld [vmem:[%s1] sm:$0xff]
      %v240 = vld [vmem:[%s1 + $0x8] sm:$0xff]
      %242 = vset.pattern.permute.xlu0 0
      %243 = vperm.xlu0 %242, %v225
      %v244 = vpop.permute.xlu0 %243
      %247 = vset.pattern.permute.xlu0 0
      %248 = vperm.xlu0 %247, %v226
      %v249 = vpop.permute.xlu0 %248
      %vm251 = vcmask 130048
      %v253 = vsel %vm251, %v239, 0
      %v256 = vsel %vm251, %v240, 0
      %258 = vmatprep.subr.mxu0 0.0
      %259 = vmatpush1.msra.mxu0 0.0
      %260 = vmatprep.subr.mxu0 0.0
      %261 = vmatpush1.msra.mxu0 0.0
      %262 = vmatprep.subr.mxu0 0.0
      %263 = vmatpush1.msra.mxu0 0.0
      %264 = vmatprep.subr.mxu0 0.0
      %265 = vmatpush1.msra.mxu0 0.0
      %266 = vmatprep.subr.mxu0 0.0
      %267 = vmatpush1.msra.mxu0 0.0
      %268 = vmatprep.subr.mxu0 0.0
      %269 = vmatpush1.msra.mxu0 0.0
      %270 = vmatprep.subr.mxu0 0.0
      %271 = vmatpush1.msra.mxu0 0.0
      %272 = vmatprep.subr.mxu0 0.0
      %273 = vmatpush1.msra.mxu0 0.0
      %274 = vmatprep.subr.mxu0 0.0
      %275 = vmatpush1.msra.mxu0 0.0
      %276 = vmatprep.subr.mxu0 0.0
      %277 = vmatpush1.msra.mxu0 0.0
      %278 = vmatprep.subr.mxu0 0.0
      %279 = vmatpush1.msra.mxu0 0.0
      %280 = vmatprep.subr.mxu0 0.0
      %281 = vmatpush1.msra.mxu0 0.0
      %282 = vmatprep.subr.mxu0 0.0
      %283 = vmatpush1.msra.mxu0 0.0
      %284 = vmatprep.subr.mxu0 0.0
      %285 = vmatpush1.msra.mxu0 0.0
      %286 = vmatprep.subr.mxu0 %v238
      %287 = vmatpush1.msra.mxu0 %v237
      %288 = vmatprep.subr.mxu0 %v236
      %289 = vmatpush1.msra.mxu0 %v235
      %290 = vmatprep.subr.mxu0 0.0
      %291 = vmatpush2.msra.mxu0 0.0
      %292 = vmatprep.subr.mxu0 0.0
      %293 = vmatpush2.msra.mxu0 0.0
      %294 = vmatprep.subr.mxu0 0.0
      %295 = vmatpush2.msra.mxu0 0.0
      %296 = vmatprep.subr.mxu0 0.0
      %297 = vmatpush2.msra.mxu0 0.0
      %298 = vmatprep.subr.mxu0 0.0
      %299 = vmatpush2.msra.mxu0 0.0
      %300 = vmatprep.subr.mxu0 0.0
      %301 = vmatpush2.msra.mxu0 0.0
      %302 = vmatprep.subr.mxu0 0.0
      %303 = vmatpush2.msra.mxu0 0.0
      %304 = vmatprep.subr.mxu0 0.0
      %305 = vmatpush2.msra.mxu0 0.0
      %306 = vmatprep.subr.mxu0 0.0
      %307 = vmatpush2.msra.mxu0 0.0
      %308 = vmatprep.subr.mxu0 0.0
      %309 = vmatpush2.msra.mxu0 0.0
      %310 = vmatprep.subr.mxu0 0.0
      %311 = vmatpush2.msra.mxu0 0.0
      %312 = vmatprep.subr.mxu0 0.0
      %313 = vmatpush2.msra.mxu0 0.0
      %314 = vmatprep.subr.mxu0 0.0
      %315 = vmatpush2.msra.mxu0 0.0
      %316 = vmatprep.subr.mxu0 0.0
      %317 = vmatpush2.msra.mxu0 0.0
      %318 = vmatprep.subr.mxu0 0.0
      %319 = vmatpush2.msra.mxu0 0.0
      %320 = vmatprep.subr.mxu0 0.0
      %321 = vmatpush2.msra.mxu0 0.0
      %322 = vmatprep.mubr.f32.mxu0 0.0
      %323 = vmatmul.mubr.f32.gmra.mxu0 %v253
      %v324 = vpop.f32.mrf.mxu0
      %v325 = vadd.f32 %v244, %v324
      %v326 = vpop.f32.mrf.mxu0
      %v327 = vadd.f32 %v244, %v326
      %328 = vmatprep.mubr.f32.mxu0 0.0
      %329 = vmatmul.mubr.f32.gmra.mxu0 %v256
      %v330 = vpop.f32.mrf.mxu0
      %v331 = vadd.f32 %v249, %v330
      %v332 = vpop.f32.mrf.mxu0
      %v333 = vadd.f32 %v249, %v332
      %334 = vdwg.mxu0
      %v335 = vmax.f32 %v325, 0.0
      %v336 = vmax.f32 %v327, 0.0
      %v337 = vmax.f32 %v331, 0.0
      %v338 = vmax.f32 %v333, 0.0
      %s339 = scalar_lea.vmem %s3, 128
      %v340 = vld [vmem:[%s339] sm:$0xff]
      %v341 = vld [vmem:[%s339 + $0x8] sm:$0xff]
      %v342 = vld [vmem:[%s339 + $0x10] sm:$0xff]
      %v343 = vld [vmem:[%s339 + $0x18] sm:$0xff]
      %v344 = vmul.f32 %v335, %v340
      %v345 = vmul.f32 %v336, %v341
      %v346 = vmul.f32 %v337, %v342
      %v347 = vmul.f32 %v338, %v343
      %348 = vrot.lane.b32.xlu0 %v335, 17
      %v349 = vpop.permute.xlu0 %348
      %350 = vrot.lane.b32.xlu0 %v337, 17
      %v351 = vpop.permute.xlu0 %350
      %352 = vrot.lane.b32.xlu0 %v336, 17
      %v353 = vpop.permute.xlu0 %352
      %354 = vrot.lane.b32.xlu0 %v338, 17
      %v355 = vpop.permute.xlu0 %354
      %v356 = vlaneseq
      %v357 = vand.u32 %v356, 127
      %vm358 = vcmp.lt.s32.totalorder %v357, 17
      %v359 = vsel %vm358, %v349, %v353
      %v360 = vsel %vm358, %v351, %v355
      %v361 = vsel %vm358, %v353, %v349
      %v362 = vsel %vm358, %v355, %v351
      %v363 = vld [vmem:[%s3] sm:$0xff]
      %v364 = vld [vmem:[%s3 + $0x8] sm:$0xff]
      %v365 = vld [vmem:[%s3 + $0x10] sm:$0xff]
      %v366 = vld [vmem:[%s3 + $0x18] sm:$0xff]
      %v367 = vmul.f32 %v361, %v363
      %v368 = vmul.f32 %v359, %v364
      %v369 = vmul.f32 %v362, %v365
      %v370 = vmul.f32 %v360, %v366
      %v371 = vadd.f32 %v344, %v367
      %v372 = vadd.f32 %v345, %v368
      %v373 = vadd.f32 %v346, %v369
      %v374 = vadd.f32 %v347, %v370
      %375 = vrot.lane.b32.xlu0 %v335, 16
      %v376 = vpop.permute.xlu0 %375
      %377 = vrot.lane.b32.xlu0 %v337, 16
      %v378 = vpop.permute.xlu0 %377
      %379 = vrot.lane.b32.xlu0 %v336, 16
      %v380 = vpop.permute.xlu0 %379
      %381 = vrot.lane.b32.xlu0 %v338, 16
      %v382 = vpop.permute.xlu0 %381
      %vm383 = vcmp.lt.s32.totalorder %v357, 16
      %v384 = vsel %vm383, %v376, %v380
      %v385 = vsel %vm383, %v378, %v382
      %v386 = vsel %vm383, %v380, %v376
      %v387 = vsel %vm383, %v382, %v378
      %s388 = scalar_lea.vmem %s3, 32
      %v389 = vld [vmem:[%s388] sm:$0xff]
      %v390 = vld [vmem:[%s388 + $0x8] sm:$0xff]
      %v391 = vld [vmem:[%s388 + $0x10] sm:$0xff]
      %v392 = vld [vmem:[%s388 + $0x18] sm:$0xff]
      %v393 = vmul.f32 %v386, %v389
      %v394 = vmul.f32 %v384, %v390
      %v395 = vmul.f32 %v387, %v391
      %v396 = vmul.f32 %v385, %v392
      %v397 = vadd.f32 %v371, %v393
      %v398 = vadd.f32 %v372, %v394
      %v399 = vadd.f32 %v373, %v395
      %v400 = vadd.f32 %v374, %v396
      %401 = vrot.lane.b32.xlu0 %v335, 15
      %v402 = vpop.permute.xlu0 %401
      %403 = vrot.lane.b32.xlu0 %v337, 15
      %v404 = vpop.permute.xlu0 %403
      %405 = vrot.lane.b32.xlu0 %v336, 15
      %v406 = vpop.permute.xlu0 %405
      %407 = vrot.lane.b32.xlu0 %v338, 15
      %v408 = vpop.permute.xlu0 %407
      %vm409 = vcmp.lt.s32.totalorder %v357, 15
      %v410 = vsel %vm409, %v402, %v406
      %v411 = vsel %vm409, %v404, %v408
      %v412 = vsel %vm409, %v406, %v402
      %v413 = vsel %vm409, %v408, %v404
      %s414 = scalar_lea.vmem %s3, 64
      %v415 = vld [vmem:[%s414] sm:$0xff]
      %v416 = vld [vmem:[%s414 + $0x8] sm:$0xff]
      %v417 = vld [vmem:[%s414 + $0x10] sm:$0xff]
      %v418 = vld [vmem:[%s414 + $0x18] sm:$0xff]
      %v419 = vmul.f32 %v412, %v415
      %v420 = vmul.f32 %v410, %v416
      %v421 = vmul.f32 %v413, %v417
      %v422 = vmul.f32 %v411, %v418
      %v423 = vadd.f32 %v397, %v419
      %v424 = vadd.f32 %v398, %v420
      %v425 = vadd.f32 %v399, %v421
      %v426 = vadd.f32 %v400, %v422
      %427 = vrot.lane.b32.xlu0 %v335, 1
      %v428 = vpop.permute.xlu0 %427
      %429 = vrot.lane.b32.xlu0 %v337, 1
      %v430 = vpop.permute.xlu0 %429
      %431 = vrot.lane.b32.xlu0 %v336, 1
      %v432 = vpop.permute.xlu0 %431
      %433 = vrot.lane.b32.xlu0 %v338, 1
      %v434 = vpop.permute.xlu0 %433
      %vm435 = vcmp.lt.s32.totalorder %v357, 1
      %v436 = vsel %vm435, %v428, %v432
      %v437 = vsel %vm435, %v430, %v434
      %v438 = vsel %vm435, %v432, %v428
      %v439 = vsel %vm435, %v434, %v430
      %s440 = scalar_lea.vmem %s3, 96
      %v441 = vld [vmem:[%s440] sm:$0xff]
      %v442 = vld [vmem:[%s440 + $0x8] sm:$0xff]
      %v443 = vld [vmem:[%s440 + $0x10] sm:$0xff]
      %v444 = vld [vmem:[%s440 + $0x18] sm:$0xff]
      %v445 = vmul.f32 %v438, %v441
      %v446 = vmul.f32 %v436, %v442
      %v447 = vmul.f32 %v439, %v443
      %v448 = vmul.f32 %v437, %v444
      %v449 = vadd.f32 %v423, %v445
      %v450 = vadd.f32 %v424, %v446
      %v451 = vadd.f32 %v425, %v447
      %v452 = vadd.f32 %v426, %v448
      %453 = vrot.lane.b32.xlu0 %v335, 127
      %v454 = vpop.permute.xlu0 %453
      %455 = vrot.lane.b32.xlu0 %v337, 127
      %v456 = vpop.permute.xlu0 %455
      %457 = vrot.lane.b32.xlu0 %v336, 127
      %v458 = vpop.permute.xlu0 %457
      %459 = vrot.lane.b32.xlu0 %v338, 127
      %v460 = vpop.permute.xlu0 %459
      %vm461 = vcmp.lt.s32.totalorder %v357, 127
      %v462 = vsel %vm461, %v454, %v458
      %v463 = vsel %vm461, %v456, %v460
      %v464 = vsel %vm461, %v458, %v454
      %v465 = vsel %vm461, %v460, %v456
      %s466 = scalar_lea.vmem %s3, 160
      %v467 = vld [vmem:[%s466] sm:$0xff]
      %v468 = vld [vmem:[%s466 + $0x8] sm:$0xff]
      %v469 = vld [vmem:[%s466 + $0x10] sm:$0xff]
      %v470 = vld [vmem:[%s466 + $0x18] sm:$0xff]
      %v471 = vmul.f32 %v462, %v467
      %v472 = vmul.f32 %v464, %v468
      %v473 = vmul.f32 %v463, %v469
      %v474 = vmul.f32 %v465, %v470
      %v475 = vadd.f32 %v449, %v471
      %v476 = vadd.f32 %v450, %v472
      %v477 = vadd.f32 %v451, %v473
      %v478 = vadd.f32 %v452, %v474
      %479 = vrot.lane.b32.xlu0 %v335, 113
      %v480 = vpop.permute.xlu0 %479
      %481 = vrot.lane.b32.xlu0 %v337, 113
      %v482 = vpop.permute.xlu0 %481
      %483 = vrot.lane.b32.xlu0 %v336, 113
      %v484 = vpop.permute.xlu0 %483
      %485 = vrot.lane.b32.xlu0 %v338, 113
      %v486 = vpop.permute.xlu0 %485
      %vm487 = vcmp.lt.s32.totalorder %v357, 113
      %v488 = vsel %vm487, %v480, %v484
      %v489 = vsel %vm487, %v482, %v486
      %v490 = vsel %vm487, %v484, %v480
      %v491 = vsel %vm487, %v486, %v482
      %s492 = scalar_lea.vmem %s3, 192
      %v493 = vld [vmem:[%s492] sm:$0xff]
      %v494 = vld [vmem:[%s492 + $0x8] sm:$0xff]
      %v495 = vld [vmem:[%s492 + $0x10] sm:$0xff]
      %v496 = vld [vmem:[%s492 + $0x18] sm:$0xff]
      %v497 = vmul.f32 %v488, %v493
      %v498 = vmul.f32 %v490, %v494
      %v499 = vmul.f32 %v489, %v495
      %v500 = vmul.f32 %v491, %v496
      %v501 = vadd.f32 %v475, %v497
      %v502 = vadd.f32 %v476, %v498
      %v503 = vadd.f32 %v477, %v499
      %v504 = vadd.f32 %v478, %v500
      %505 = vrot.lane.b32.xlu0 %v335, 112
      %v506 = vpop.permute.xlu0 %505
      %507 = vrot.lane.b32.xlu0 %v337, 112
      %v508 = vpop.permute.xlu0 %507
      %509 = vrot.lane.b32.xlu0 %v336, 112
      %v510 = vpop.permute.xlu0 %509
      %511 = vrot.lane.b32.xlu0 %v338, 112
      %v512 = vpop.permute.xlu0 %511
      %vm513 = vcmp.lt.s32.totalorder %v357, 112
      %v514 = vsel %vm513, %v506, %v510
      %v515 = vsel %vm513, %v508, %v512
      %v516 = vsel %vm513, %v510, %v506
      %v517 = vsel %vm513, %v512, %v508
      %s518 = scalar_lea.vmem %s3, 224
      %v519 = vld [vmem:[%s518] sm:$0xff]
      %v520 = vld [vmem:[%s518 + $0x8] sm:$0xff]
      %v521 = vld [vmem:[%s518 + $0x10] sm:$0xff]
      %v522 = vld [vmem:[%s518 + $0x18] sm:$0xff]
      %v523 = vmul.f32 %v514, %v519
      %v524 = vmul.f32 %v516, %v520
      %v525 = vmul.f32 %v515, %v521
      %v526 = vmul.f32 %v517, %v522
      %v527 = vadd.f32 %v501, %v523
      %v528 = vadd.f32 %v502, %v524
      %v529 = vadd.f32 %v503, %v525
      %v530 = vadd.f32 %v504, %v526
      %531 = vrot.lane.b32.xlu0 %v335, 111
      %v532 = vpop.permute.xlu0 %531
      %533 = vrot.lane.b32.xlu0 %v337, 111
      %v534 = vpop.permute.xlu0 %533
      %535 = vrot.lane.b32.xlu0 %v336, 111
      %v536 = vpop.permute.xlu0 %535
      %537 = vrot.lane.b32.xlu0 %v338, 111
      %v538 = vpop.permute.xlu0 %537
      %vm539 = vcmp.lt.s32.totalorder %v357, 111
      %v540 = vsel %vm539, %v532, %v536
      %v541 = vsel %vm539, %v534, %v538
      %v542 = vsel %vm539, %v536, %v532
      %v543 = vsel %vm539, %v538, %v534
      %s544 = scalar_lea.vmem %s3, 256
      %v545 = vld [vmem:[%s544] sm:$0xff]
      %v546 = vld [vmem:[%s544 + $0x8] sm:$0xff]
      %v547 = vld [vmem:[%s544 + $0x10] sm:$0xff]
      %v548 = vld [vmem:[%s544 + $0x18] sm:$0xff]
      %v549 = vmul.f32 %v540, %v545
      %v550 = vmul.f32 %v542, %v546
      %v551 = vmul.f32 %v541, %v547
      %v552 = vmul.f32 %v543, %v548
      %v553 = vadd.f32 %v527, %v549
      %v554 = vadd.f32 %v528, %v550
      %v555 = vadd.f32 %v529, %v551
      %v556 = vadd.f32 %v530, %v552
      %557 = vset.pattern.permute.xlu0 1
      %558 = vperm.xlu0 %557, %v225
      %v559 = vpop.permute.xlu0 %558
      %561 = vset.pattern.permute.xlu0 1
      %562 = vperm.xlu0 %561, %v226
      %v563 = vpop.permute.xlu0 %562
      %v565 = vadd.f32 %v553, %v559
      %v566 = vadd.f32 %v554, %v559
      %v567 = vadd.f32 %v555, %v563
      %v568 = vadd.f32 %v556, %v563
      %v569 = vld [vmem:[%s4] sm:$0xff]
      %v570 = vld [vmem:[%s4 + $0x8] sm:$0xff]
      %571 = vset.pattern.permute.xlu0 2
      %572 = vperm.xlu0 %571, %v225
      %v573 = vpop.permute.xlu0 %572
      %575 = vset.pattern.permute.xlu0 2
      %576 = vperm.xlu0 %575, %v226
      %v577 = vpop.permute.xlu0 %576
      %v580 = vsel %vm251, %v569, 0
      %v583 = vsel %vm251, %v570, 0
      %585 = vmatprep.subr.mxu0 0.0
      %586 = vmatpush1.msra.mxu0 0.0
      %587 = vmatprep.subr.mxu0 0.0
      %588 = vmatpush1.msra.mxu0 0.0
      %589 = vmatprep.subr.mxu0 0.0
      %590 = vmatpush1.msra.mxu0 0.0
      %591 = vmatprep.subr.mxu0 0.0
      %592 = vmatpush1.msra.mxu0 0.0
      %593 = vmatprep.subr.mxu0 0.0
      %594 = vmatpush1.msra.mxu0 0.0
      %595 = vmatprep.subr.mxu0 0.0
      %596 = vmatpush1.msra.mxu0 0.0
      %597 = vmatprep.subr.mxu0 0.0
      %598 = vmatpush1.msra.mxu0 0.0
      %599 = vmatprep.subr.mxu0 0.0
      %600 = vmatpush1.msra.mxu0 0.0
      %601 = vmatprep.subr.mxu0 0.0
      %602 = vmatpush1.msra.mxu0 0.0
      %603 = vmatprep.subr.mxu0 0.0
      %604 = vmatpush1.msra.mxu0 0.0
      %605 = vmatprep.subr.mxu0 0.0
      %606 = vmatpush1.msra.mxu0 0.0
      %607 = vmatprep.subr.mxu0 0.0
      %608 = vmatpush1.msra.mxu0 0.0
      %609 = vmatprep.subr.mxu0 0.0
      %610 = vmatpush1.msra.mxu0 0.0
      %611 = vmatprep.subr.mxu0 0.0
      %612 = vmatpush1.msra.mxu0 0.0
      %613 = vmatprep.subr.mxu0 %v568
      %614 = vmatpush1.msra.mxu0 %v567
      %615 = vmatprep.subr.mxu0 %v566
      %616 = vmatpush1.msra.mxu0 %v565
      %617 = vmatprep.subr.mxu0 0.0
      %618 = vmatpush2.msra.mxu0 0.0
      %619 = vmatprep.subr.mxu0 0.0
      %620 = vmatpush2.msra.mxu0 0.0
      %621 = vmatprep.subr.mxu0 0.0
      %622 = vmatpush2.msra.mxu0 0.0
      %623 = vmatprep.subr.mxu0 0.0
      %624 = vmatpush2.msra.mxu0 0.0
      %625 = vmatprep.subr.mxu0 0.0
      %626 = vmatpush2.msra.mxu0 0.0
      %627 = vmatprep.subr.mxu0 0.0
      %628 = vmatpush2.msra.mxu0 0.0
      %629 = vmatprep.subr.mxu0 0.0
      %630 = vmatpush2.msra.mxu0 0.0
      %631 = vmatprep.subr.mxu0 0.0
      %632 = vmatpush2.msra.mxu0 0.0
      %633 = vmatprep.subr.mxu0 0.0
      %634 = vmatpush2.msra.mxu0 0.0
      %635 = vmatprep.subr.mxu0 0.0
      %636 = vmatpush2.msra.mxu0 0.0
      %637 = vmatprep.subr.mxu0 0.0
      %638 = vmatpush2.msra.mxu0 0.0
      %639 = vmatprep.subr.mxu0 0.0
      %640 = vmatpush2.msra.mxu0 0.0
      %641 = vmatprep.subr.mxu0 0.0
      %642 = vmatpush2.msra.mxu0 0.0
      %643 = vmatprep.subr.mxu0 0.0
      %644 = vmatpush2.msra.mxu0 0.0
      %645 = vmatprep.subr.mxu0 0.0
      %646 = vmatpush2.msra.mxu0 0.0
      %647 = vmatprep.subr.mxu0 0.0
      %648 = vmatpush2.msra.mxu0 0.0
      %649 = vmatprep.mubr.f32.mxu0 0.0
      %650 = vmatmul.mubr.f32.gmra.mxu0 %v580
      %v651 = vpop.f32.mrf.mxu0
      %v652 = vadd.f32 %v573, %v651
      %v653 = vpop.f32.mrf.mxu0
      %v654 = vadd.f32 %v573, %v653
      %655 = vmatprep.mubr.f32.mxu0 0.0
      %656 = vmatmul.mubr.f32.gmra.mxu0 %v583
      %v657 = vpop.f32.mrf.mxu0
      %v658 = vadd.f32 %v577, %v657
      %v659 = vpop.f32.mrf.mxu0
      %v660 = vadd.f32 %v577, %v659
      %661 = vdwg.mxu0
      %v662 = vmax.f32 %v652, 0.0
      %v663 = vmax.f32 %v654, 0.0
      %v664 = vmax.f32 %v658, 0.0
      %v665 = vmax.f32 %v660, 0.0
      %666 = vst [vmem:[%s224 + $0x10] sm:$0xff] %v662
      %667 = vst [vmem:[%s224 + $0x18] sm:$0xff] %v663
      %668 = vst [vmem:[%s224 + $0x30] sm:$0xff] %v664
      %669 = vst [vmem:[%s224 + $0x38] sm:$0xff] %v665
      %p670 = scmp.lt.s32.totalorder %s16, 1
      %s671 = scalar_select %p670, %s16, 1
      %s672 = smul.addr %s671, 8
      %s673 = smul.addr %s672, 8
      %s674 = scalar_lea.vmem %s5, %s673
      // Predicated region
      $region41: #{_lambda_.1} parent=39 // pred_check
        %p675 = pneg %p144
      $region42: #{_lambda_.1} parent=39 // pred_check_branch
        %677 = sbr.rel (%p675) target = $region44
      $region43: #{_lambda_.1} parent=39 // pred_region
        _
      $region44: #{_lambda_.1} parent=39 // pred_fallthru
        _
    $region40: #{_lambda_.1} parent=5 // pred_fallthru
      _
    %p678 = scmp.le.s32.totalorder 2, %s11
    // Predicated region
    $region45: #{_lambda_.1} parent=5 // pred_check
      %p679 = pneg %p678
    $region46: #{_lambda_.1} parent=5 // pred_check_branch
      %681 = sbr.rel (%p679) target = $region48
    $region47: #{_lambda_.1} parent=5 // pred_region
      %s682 = ssub.s32 %s11, 2
      // Predicated region
      $region49: #{_lambda_.1} parent=47 // pred_check
        %p683 = pneg %p150
      $region50: #{_lambda_.1} parent=47 // pred_check_branch
        %685 = sbr.rel (%p683) target = $region52
      $region51: #{_lambda_.1} parent=47 // pred_region
        %p686 = scmp.lt.s32.totalorder %s17, 1
        %s687 = scalar_select %p686, %s17, 1
        %s688 = smul.addr %s687, 8
        %s689 = smul.addr %s688, 8
        %s690 = scalar_lea.vmem %s5, %s689
      $region52: #{_lambda_.1} parent=47 // pred_fallthru
        _
    $region48: #{_lambda_.1} parent=5 // pred_fallthru
      _
  $region6: #{_lambda_.1} parent=0 // loop_footer
    %s15 = sadd.s32 1, %s11
  $region7: #{_lambda_.1} parent=0 // loop_footer_branch
    %10 = sbr.rel target = $region3
  $region8: #{_lambda_.1} parent=0 // loop_exit
    _

</llo_original>
